<compile_context>
chip_gen: v7x
topology: tpu7x:2x2x1
jax: 0.10.0
libtpu: 0.0.40
codegen_flags: <defaults>
</compile_context>

<pallas_src>
import functools

import numpy as np
import jax
import jax.numpy as jnp
from jax.experimental import pallas as pl
from jax.experimental.pallas import tpu as pltpu

C_IN = 64
C_RED = C_IN // 16      # 4
C_OUT = 32
K7 = 7
PAD7 = 3
LANE = 128
N_ACC = 4               # independent partial accumulators in the 7x7 tap loop


# --------------------------------------------------------------------- roll-direction probe
_ROLL_SIGN = None


def _roll_probe_kernel(x_ref, o_ref):
    o_ref[...] = pltpu.roll(x_ref[...], 1, 1)


def _roll_sign():
    """Empirically pin pltpu.roll's rotation convention (runs one tiny kernel, cached).

    Returns s such that  pltpu.roll(x, (s*k) % n, axis=-1)[..., p] == x[..., (p + k) % n].
    """
    global _ROLL_SIGN
    if _ROLL_SIGN is None:
        x = jnp.arange(LANE, dtype=jnp.float32).reshape(1, LANE)
        y = pl.pallas_call(_roll_probe_kernel,
                           out_shape=jax.ShapeDtypeStruct((1, LANE), jnp.float32))(x)
        first = float(np.asarray(jax.block_until_ready(y))[0, 0])
        # jnp.roll convention: y[0] == x[-1] == 127  ->  sign = -1 ; otherwise y[0] == x[1].
        _ROLL_SIGN = -1 if first > 64.0 else 1
    return _ROLL_SIGN


# ----------------------------------------------------------------------------- kernel
def sa_kernel(x_ref, mask_ref, w12_ref, w34_ref, wc1_ref, bc1_ref, w7_ref,
              res0_ref, res_ref, *, HW, W_s, N_pad, roll_sign):
    xb = x_ref[0]                                   # (C_IN, N_pad) bf16; 0 at gap/tail lanes
    xf = xb.astype(jnp.float32)                     # element-wise path in f32 (v5e-safe)

    # ---- channel attention: global avg/max pool + fused 2-layer MLP (2 matmuls, not 4) ----
    avg = jnp.sum(xf, axis=1, keepdims=True) * (1.0 / HW)                 # (C_IN, 1)
    xmask = jnp.where(mask_ref[...] > 0.5, xf, -jnp.inf)                  # mask gap lanes
    mx = jnp.max(xmask, axis=1, keepdims=True)                            # (C_IN, 1)
    v = jnp.concatenate([avg, mx], axis=0)                                # (2*C_IN, 1)
    h = jnp.maximum(
        jnp.dot(w12_ref[...], v, preferred_element_type=jnp.float32), 0.0)   # (2*C_RED, 1)
    am = jnp.dot(w34_ref[...], h, preferred_element_type=jnp.float32)        # (C_IN, 1)
    ca = jax.nn.sigmoid(am)
    t = ca * xf                                                           # (C_IN, N_pad); 0 at gaps

    # ---- spatial attention: mean + max over channels, then 7x7 "same" conv ----
    smap = jnp.mean(t, axis=0, keepdims=True) + jnp.max(t, axis=0, keepdims=True)  # (1, N_pad)
    # Row-gap layout invariant: every tap that falls outside the HxW image reads a zero
    # gap/tail lane, so the loop body is a single roll (XLU) + FMA (VALU) per tap -- no masks.
    accs = [jnp.zeros_like(smap) for _ in range(N_ACC)]
    idx = 0
    for a in range(K7):
        for b in range(K7):
            s = (a - PAD7) * W_s + (b - PAD7)       # want shifted[p] == smap[p + s]
            shift = (roll_sign * s) % N_pad
            sh = smap if shift == 0 else pltpu.roll(smap, shift, 1)
            accs[idx % N_ACC] = accs[idx % N_ACC] + sh * w7_ref[a, b]
            idx += 1
    conv = (accs[0] + accs[1]) + (accs[2] + accs[3])
    res_sp = jax.nn.sigmoid(conv) * t               # (C_IN, N_pad); still 0 at gaps (t == 0)

    # ---- conv1: 1x1 conv 64->32 + bias (BN folded): two dots, shared LHS, no concat ----
    out_sp = jnp.dot(wc1_ref[...], res_sp.astype(jnp.bfloat16),
                     preferred_element_type=jnp.float32)                  # (C_OUT, N_pad)
    out_x = jnp.dot(wc1_ref[...], xb, preferred_element_type=jnp.float32) # (C_OUT, N_pad)
    bc1 = bc1_ref[...]
    r0 = out_sp + bc1
    res0_ref[0] = r0                                # res0 = conv1(res_sp)
    res_ref[0] = r0 + (out_x + bc1)                 # res  = conv1(res_sp) + conv1(x1)


# ----------------------------------------------------------------------------- wrapper
def sa_forward(x1, w12, w34, wc1, bc1, w7):
    """x1: (B, 64, H, W) f32 NCHW. Returns (res0, res), each (B, 32, H, W) f32."""
    B, C, H, W = x1.shape
    assert C == C_IN
    HW = H * W
    W_s = W + PAD7                                  # 3 zero gap columns per image row
    n_raw = (H + PAD7) * W_s + PAD7                 # >= 3 zero rows below the image
    N_pad = ((n_raw + LANE - 1) // LANE) * LANE     # lane-dense flattened spatial axis

    # NCHW -> row-gap flattened (B, C, N_pad); zeros everywhere outside the true image.
    xg = jnp.pad(x1, ((0, 0), (0, 0), (0, 0), (0, W_s - W))).reshape(B, C, H * W_s)
    xg = jnp.pad(xg, ((0, 0), (0, 0), (0, N_pad - H * W_s))).astype(jnp.bfloat16)
    wc1_b = wc1.astype(jnp.bfloat16)

    # validity mask (1 inside the HxW image, 0 at gap/tail lanes) for the channel max-pool
    col = np.arange(N_pad)
    mask = jnp.asarray(((col < H * W_s) & (col % W_s < W))
                       .astype(np.float32).reshape(1, N_pad))

    kernel = functools.partial(sa_kernel, HW=HW, W_s=W_s, N_pad=N_pad,
                               roll_sign=_roll_sign())

    out_shape = (jax.ShapeDtypeStruct((B, C_OUT, N_pad), jnp.float32),
                 jax.ShapeDtypeStruct((B, C_OUT, N_pad), jnp.float32))

    res0, res = pl.pallas_call(
        kernel,
        out_shape=out_shape,
        grid=(B,),
        in_specs=[
            pl.BlockSpec((1, C, N_pad), lambda b: (b, 0, 0)),
            pl.BlockSpec((1, N_pad), lambda b: (0, 0)),
            pl.BlockSpec(w12.shape, lambda b: (0, 0)),
            pl.BlockSpec(w34.shape, lambda b: (0, 0)),
            pl.BlockSpec(wc1_b.shape, lambda b: (0, 0)),
            pl.BlockSpec(bc1.shape, lambda b: (0, 0)),
            pl.BlockSpec(memory_space=pltpu.MemorySpace.SMEM),   # 7x7 weights, scalar reads
        ],
        out_specs=[
            pl.BlockSpec((1, C_OUT, N_pad), lambda b: (b, 0, 0)),
            pl.BlockSpec((1, C_OUT, N_pad), lambda b: (b, 0, 0)),
        ],
        compiler_params=pltpu.CompilerParams(
            dimension_semantics=("parallel",),       # v7x: 2 TCs busy for B >= 2
            vmem_limit_bytes=48 * 1024 * 1024,
        ),
    )(xg, mask, w12, w34, wc1_b, bc1, w7)

    res0 = res0[:, :, :H * W_s].reshape(B, C_OUT, H, W_s)[:, :, :, :W]
    res = res[:, :, :H * W_s].reshape(B, C_OUT, H, W_s)[:, :, :, :W]
    return res0, res


# ----------------------------------------------------------------------------- glue
def patch_embed_standin(x, w_pe, b_pe):
    """Stand-in for the PVTv2-B2 stage-1 feature: stride-4 non-overlapping patch projection.
    x: (B, 3, H, W) NCHW -> x1: (B, 64, H//4, W//4)."""
    B, Ci, H, W = x.shape
    P = 4
    xp = x.reshape(B, Ci, H // P, P, W // P, P)
    xp = xp.transpose(0, 2, 4, 1, 3, 5).reshape(B, (H // P) * (W // P), Ci * P * P)
    feat = xp @ w_pe + b_pe                                          # (B, HW/16, 64)
    return feat.transpose(0, 2, 1).reshape(B, C_IN, H // P, W // P)


def reference(x1, w1, w2, w3, w4, w7, wc1, bc1):
    """Pure-JAX f32 reference of the SA head (NCHW), used only to validate the kernel."""
    avg = jnp.mean(x1, axis=(2, 3))                                  # (B, C)
    mx = jnp.max(x1, axis=(2, 3))

    def mlp(v, wa, wb):
        return jnp.maximum(v @ wa.T, 0.0) @ wb.T

    am = mlp(avg, w1, w3) + mlp(mx, w2, w4)
    t = jax.nn.sigmoid(am)[:, :, None, None] * x1
    smap = jnp.mean(t, axis=1, keepdims=True) + jnp.max(t, axis=1, keepdims=True)
    conv = jax.lax.conv_general_dilated(
        smap, w7[None, None], window_strides=(1, 1), padding=[(PAD7, PAD7), (PAD7, PAD7)],
        dimension_numbers=("NCHW", "OIHW", "NCHW"))
    res_sp = jax.nn.sigmoid(conv) * t
    b = bc1.reshape(1, -1, 1, 1)
    out_a = jnp.einsum("oc,bchw->bohw", wc1, res_sp) + b
    out_b = jnp.einsum("oc,bchw->bohw", wc1, x1) + b
    return out_a, out_a + out_b


# ----------------------------------------------------------------------------- main
if __name__ == "__main__":
    key = jax.random.PRNGKey(0)
    ks = jax.random.split(key, 12)

    B, Ci, H0, W0 = 2, 3, 64, 64                 # image input; x1 becomes (2, 64, 16, 16)
    x = jax.random.normal(ks[0], (B, Ci, H0, W0), jnp.float32)

    # deterministic synthetic parameters (shapes implied by the module's __init__)
    w_pe = jax.random.normal(ks[1], (Ci * 16, C_IN), jnp.float32) / np.sqrt(Ci * 16)
    b_pe = jnp.zeros((C_IN,), jnp.float32)
    w1 = jax.random.normal(ks[2], (C_RED, C_IN), jnp.float32) / np.sqrt(C_IN)   # fc1
    w2 = jax.random.normal(ks[3], (C_RED, C_IN), jnp.float32) / np.sqrt(C_IN)   # fc2
    w3 = jax.random.normal(ks[4], (C_IN, C_RED), jnp.float32) / np.sqrt(C_RED)  # fc3
    w4 = jax.random.normal(ks[5], (C_IN, C_RED), jnp.float32) / np.sqrt(C_RED)  # fc4
    w7 = jax.random.normal(ks[6], (K7, K7), jnp.float32) / float(K7)            # 7x7 conv (1->1)
    wc1_raw = jax.random.normal(ks[7], (C_OUT, C_IN), jnp.float32) / np.sqrt(C_IN)
    bc1_raw = jax.random.normal(ks[8], (C_OUT,), jnp.float32) * 0.1

    # fold eval-mode BN (gamma=1, beta=0, mean=0, var=1, eps=1e-5) into conv1
    eps = 1e-5
    bn_scale = 1.0 / jnp.sqrt(1.0 + eps)
    wc1 = wc1_raw * bn_scale
    bc1 = bc1_raw * bn_scale

    # fused channel-attention MLP weights (built once in glue)
    W12 = jnp.zeros((2 * C_RED, 2 * C_IN), jnp.float32)   # block-diag [w1 0; 0 w2] -> (8, 128)
    W12 = W12.at[:C_RED, :C_IN].set(w1)
    W12 = W12.at[C_RED:, C_IN:].set(w2)
    W34 = jnp.concatenate([w3, w4], axis=1)               # [w3 | w4] -> (64, 8)

    # backbone stand-in (plain-JAX glue)
    x1 = patch_embed_standin(x, w_pe, b_pe)      # (2, 64, 16, 16)

    res0, res = sa_forward(x1, W12, W34, wc1, bc1.reshape(C_OUT, 1), w7)
    jax.block_until_ready((res0, res))

    r0_ref, r_ref = reference(x1, w1, w2, w3, w4, w7, wc1, bc1)
    _, _, H, W = x1.shape
    assert res0.shape == (B, C_OUT, H, W) and res.shape == (B, C_OUT, H, W)
    np.testing.assert_allclose(np.asarray(res0), np.asarray(r0_ref), rtol=5e-2, atol=5e-2)
    np.testing.assert_allclose(np.asarray(res), np.asarray(r_ref), rtol=5e-2, atol=5e-2)

    print("KERNEL_OK")
</pallas_src>

<mosaic_0001>
module attributes {stable_mosaic.version = 11 : i64} {
  func.func @_roll_probe_kernel(%arg0: memref<1x128xf32, #tpu.memory_space<vmem>>, %arg1: memref<1x128xf32, #tpu.memory_space<vmem>>) attributes {dimension_semantics = [], scalar_prefetch = 0 : i64, scratch_operands = 0 : i64, tpu.core_type = #tpu.core_type<tc>} {
    %c0 = arith.constant 0 : index
    %c0_0 = arith.constant 0 : index
    %0 = vector.load %arg0[%c0, %c0_0] : memref<1x128xf32, #tpu.memory_space<vmem>>, vector<1x128xf32>
    %c1_i32 = arith.constant 1 : i32
    %1 = tpu.dynamic_rotate %0 by %c1_i32 dim 1 : vector<1x128xf32>, i32 -> vector<1x128xf32>
    %c0_1 = arith.constant 0 : index
    %c0_2 = arith.constant 0 : index
    %2 = vector.load %arg1[%c0_1, %c0_2] : memref<1x128xf32, #tpu.memory_space<vmem>>, vector<1x128xf32>
    tpu.vector_store %arg1[%c0_1, %c0_2], %1 {strides = array<i32>} : memref<1x128xf32, #tpu.memory_space<vmem>>, vector<1x128xf32>,
    return
  }
}

</mosaic_0001>

<llo_original>
// kernel: tpu_custom_call.1
$region0: #{tpu_custom_call.1}
  #allocation0 [shape = 'u32[]', space=smem, size = 0x4, offset = 0x4, fixed_abs, tag = 'smem constant byte address 0x4 - core index']
  #allocation1 [shape = 'u32[144,128]{1,0:T(1,128)}', space=vmem, size = 0x12000, scoped, tag = 'internal scratch']
  %s0 = inlined_call_operand.hbm [shape: f32[1,128], index: 0, kind: input, shape index: {}]
  %s1 = inlined_call_operand.hbm [shape: f32[1,128], index: 1, kind: output, shape index: {}]
  %s2 = sld [smem:[#allocation0]]
  $region18: #{tpu_custom_call.1} parent=0
    _
  %s4 = ssub.s32 1, %s2
  %s5 = scalar_select 0, %s4, %s2
  $region1: #{tpu_custom_call.1} parent=0
    #allocation2 [shape = 'u8[512]{0}', space=vmem, size = 0x400, scoped, tag = 'input window, operand 0, single buffered']
    #allocation3 [shape = 's32[1]{0}', space=sflag, size = 0x4, scoped, tag = 'scoped memory for tpu_custom_call.1']
    #allocation4 [shape = 's32[1]{0}', space=sflag, size = 0x4, scoped, tag = 'scoped memory for tpu_custom_call.1']
    #allocation5 [shape = 'u8[512]{0}', space=vmem, size = 0x400, scoped, tag = 'output window, operand 0, single buffered']
    %6 = vsyncpa [#allocation3], 0
    %7 = vsyncpa [#allocation4], 0
    // Predicated region
    $region2: #{tpu_custom_call.1} parent=1 // pred_check
      _
    $region3: #{tpu_custom_call.1} parent=1 // pred_check_branch
      %9 = sbr.rel (0) target = $region5
    $region4: #{tpu_custom_call.1} parent=1 // pred_region
      %s11 = ssub.s32 16, 16
      %12 = vsyncadd [#allocation3], %s11
      %s14 = sshll.u32 [#allocation2], 4
      %s15 = int_to_ptr.vmem [resolvable:$true] %s14
      %17 = dma.hbm_to_vmem [thread:$0]  %s0, 16, %s15, [#allocation3]
    $region5: #{tpu_custom_call.1} parent=1 // pred_fallthru
      _
    // Predicated region
    $region6: #{tpu_custom_call.1} parent=1 // pred_check
      _
    $region7: #{tpu_custom_call.1} parent=1 // pred_check_branch
      %19 = sbr.rel (0) target = $region9
    $region8: #{tpu_custom_call.1} parent=1 // pred_region
      %20 = dma.done [#allocation3], 16
    $region9: #{tpu_custom_call.1} parent=1 // pred_fallthru
      _
    %v21 = vld [vmem:[#allocation2] sm:$0x1]
    %22 = vrot.lane.b32.xlu0 %v21, 1
    %v23 = vpop.permute.xlu0 %22
    %24 = vst [vmem:[#allocation5] sm:$0x1] %v23
    // Predicated region
    $region10: #{tpu_custom_call.1} parent=1 // pred_check
      _
    $region11: #{tpu_custom_call.1} parent=1 // pred_check_branch
      %26 = sbr.rel (0) target = $region13
    $region12: #{tpu_custom_call.1} parent=1 // pred_region
      %s28 = ssub.s32 16, 16
      %29 = vsyncadd [#allocation4], %s28
      %s31 = sshll.u32 [#allocation5], 4
      %s32 = int_to_ptr.vmem [resolvable:$true] %s31
      %34 = dma.vmem_to_hbm [thread:$0]  %s32, 16, %s1, [#allocation4]
    $region13: #{tpu_custom_call.1} parent=1 // pred_fallthru
      _
    // Predicated region
    $region14: #{tpu_custom_call.1} parent=1 // pred_check
      _
    $region15: #{tpu_custom_call.1} parent=1 // pred_check_branch
      %36 = sbr.rel (0) target = $region17
    $region16: #{tpu_custom_call.1} parent=1 // pred_region
      %37 = dma.done [#allocation4], 16
    $region17: #{tpu_custom_call.1} parent=1 // pred_fallthru
      _
    %38 = vsyncpa [#allocation3], 1
    %39 = vsyncpa [#allocation4], 1

</llo_original>
